<compile_context>
chip_gen: v5e
topology: v5e:2x2
jax: 0.10.0
libtpu: 0.0.40
codegen_flags: <defaults>
</compile_context>

<pallas_src>
import functools
import re

import jax
import jax.numpy as jnp
from jax.experimental import pallas as pl
from jax.experimental.pallas import tpu as pltpu

# Deterministic stand-in for cfg.max_action (synthetic config value).
MAX_ACTION = 2.0

_TARGET_TILE_BYTES = 2 * 1024 * 1024   # ~2 MiB tiles: ~85%+ of HBM roofline
_SUBLANE = 16                          # sublane granularity valid for f32 and bf16
_MAX_FULL_LANE = 2048                  # use full last dim as lane block up to this width
_FAST_PATH_ELEMS = 1 << 20             # below ~1M elems, let XLA fuse the elementwise op


def _round_up(a, b):
    return ((a + b - 1) // b) * b


def _round_down(a, b):
    return (a // b) * b


def _cdiv(a, b):
    return -(-a // b)


def _tpu_generation():
    """Best-effort TPU generation as an int (5, 6, 7, ...); 0 if unknown."""
    try:
        kind = jax.devices()[0].device_kind.lower()
    except Exception:
        return 0
    m = re.search(r"v(\d+)", kind)
    return int(m.group(1)) if m else 0


def _scaled_tanh_ref(x):
    """Pure-JAX reference / fallback path."""
    return (jnp.tanh(x.astype(jnp.float32)) * MAX_ACTION).astype(x.dtype)


def _scaled_tanh_kernel(x_ref, o_ref, *, compute_dtype):
    # Elementwise hot path: tanh on the EUP, scale on the VPU, one cast on store.
    xv = x_ref[...].astype(compute_dtype)
    o_ref[...] = (jnp.tanh(xv) * MAX_ACTION).astype(o_ref.dtype)


def _scaled_tanh_2d(x2d, *, compute_dtype, n_cores, donate):
    """Tile a lane-dense 2-D slab; no padding, partial row blocks are clipped."""
    R, D = x2d.shape
    itemsize = jnp.dtype(x2d.dtype).itemsize
    n = x2d.size

    # Lane (last-dim) block: full extent when modest, else a 128-multiple divisor.
    if D <= _MAX_FULL_LANE:
        bd = D
    else:
        bd = 512 if D % 512 == 0 else (256 if D % 256 == 0 else 128)

    # Row block: ~2 MiB per tile regardless of dtype, sublane-aligned.
    max_rows = max(_SUBLANE, _round_down(_TARGET_TILE_BYTES // (bd * itemsize), _SUBLANE))
    if R <= max_rows:
        if n_cores >= 2 and R >= 2 * _SUBLANE:
            # v7x only: two steps so the "parallel" axis shards across both TCs.
            bm = _round_up(_cdiv(R, 2), _SUBLANE)
        else:
            # v5e/v6e: single biggest (full-extent) tile -- grid is a serial loop.
            bm = R
    else:
        bm = max_rows
        steps = _cdiv(R, bm)
        if n_cores >= 2 and steps < 8 and steps % 2 == 1:
            # Keep the parallel step count even so v7x's two TCs stay balanced.
            bm = _round_up(_cdiv(R, steps + 1), _SUBLANE)

    grid = (_cdiv(R, bm), D // bd)

    kernel = functools.partial(_scaled_tanh_kernel, compute_dtype=compute_dtype)

    # TODO(synk): on v7x with bf16 I/O, sweep pipeline_mode=pl.Buffered(3) on the
    # input BlockSpec; left at the default double buffer here.
    return pl.pallas_call(
        kernel,
        out_shape=jax.ShapeDtypeStruct((R, D), x2d.dtype),
        grid_spec=pltpu.PrefetchScalarGridSpec(
            num_scalar_prefetch=0,
            grid=grid,
            in_specs=[pl.BlockSpec((bm, bd), lambda i, j: (i, j))],
            out_specs=pl.BlockSpec((bm, bd), lambda i, j: (i, j)),
        ),
        compiler_params=pltpu.CompilerParams(
            dimension_semantics=("parallel", "parallel"),
            vmem_limit_bytes=32 * 1024 * 1024,
        ),
        cost_estimate=pl.CostEstimate(
            flops=n, transcendentals=n, bytes_accessed=2 * n * itemsize),
        input_output_aliases={0: 0} if donate else {},
    )(x2d)


def scaled_tanh(x, *, force_pallas=False, donate=False):
    """y = tanh(x) * MAX_ACTION for any shape / float dtype (ScaledTanh.forward)."""
    n = x.size
    if n == 0:
        return x
    if not force_pallas and n < _FAST_PATH_ELEMS:
        # Tiny tensors (the common SAC action-head case): custom-call dispatch +
        # pipeline prologue cost more than the op; XLA fuses tanh into the producer.
        return _scaled_tanh_ref(x)

    gen = _tpu_generation()
    n_cores = 2 if gen >= 7 else 1            # v7x: 2 TCs/chip; v5e/v6e: 1
    # bf16-native tanh on v6e/v7x (bf16 EUP/VPU); f32 compute on v5e/older/unknown.
    if x.dtype == jnp.bfloat16 and gen >= 6:
        compute_dtype = jnp.bfloat16
    else:
        compute_dtype = jnp.float32

    orig_shape = x.shape
    if x.ndim >= 2 and orig_shape[-1] % 128 == 0:
        # Natural layout already lane-aligned: collapse leading dims (free reshape).
        x2d = x.reshape(-1, orig_shape[-1])
    else:
        # Ragged last dim: reinterpret the flat contiguous buffer as a lane-dense
        # slab (free reshape) -- no pad / slice passes over HBM.
        lane = next((L for L in (512, 256, 128) if n % L == 0), None)
        if lane is None:
            # TODO(synk): truly ragged sizes (n % 128 != 0) would need an in-kernel
            # masked tail store; such large tensors are rare, so fall back to XLA
            # rather than paying extra pad + slice HBM passes.
            return _scaled_tanh_ref(x)
        x2d = x.reshape(-1, lane)

    try:
        y2d = _scaled_tanh_2d(x2d, compute_dtype=compute_dtype,
                              n_cores=n_cores, donate=donate)
    except Exception:
        if compute_dtype == jnp.float32:
            raise
        # Safety net: if bf16-native tanh fails to lower on this chip, retry in f32.
        y2d = _scaled_tanh_2d(x2d, compute_dtype=jnp.float32,
                              n_cores=n_cores, donate=donate)
    return y2d.reshape(orig_shape)


if __name__ == "__main__":
    key = jax.random.PRNGKey(0)
    k1, k2, k3 = jax.random.split(key, 3)

    # 1) SAC action-head-like batch, forced through the Pallas kernel.
    x_small = jax.random.normal(k1, (8, 128), dtype=jnp.float32)
    y_small = scaled_tanh(x_small, force_pallas=True)

    # 2) Ragged last dim (flat size divisible by 128 -> free lane-dense reshape).
    x_mid = jax.random.normal(k2, (384, 200), dtype=jnp.float32)
    y_mid = scaled_tanh(x_mid, force_pallas=True)

    # 3) bf16 storage path (bf16-native tanh on v6e/v7x, f32 compute on v5e).
    x_bf16 = x_mid.astype(jnp.bfloat16)
    y_bf16 = scaled_tanh(x_bf16, force_pallas=True)

    # 4) Larger lane-aligned input: exercises the multi-step tiled grid and the
    #    natural (non-forced) Pallas dispatch (>= _FAST_PATH_ELEMS elements).
    x_big = jax.random.normal(k3, (4096, 512), dtype=jnp.float32)
    y_big = scaled_tanh(x_big)

    # 5) Size not divisible by 128 -> pure-XLA fallback (no pad/slice HBM passes).
    x_odd = jax.random.normal(k1, (7, 13), dtype=jnp.float32)
    y_odd = scaled_tanh(x_odd, force_pallas=True)

    jax.block_until_ready((y_small, y_mid, y_bf16, y_big, y_odd))

    # Correctness checks against the pure-JAX reference.
    for x, y in ((x_small, y_small), (x_mid, y_mid), (x_big, y_big), (x_odd, y_odd)):
        ref = jnp.tanh(x) * MAX_ACTION
        assert y.shape == x.shape and y.dtype == x.dtype
        assert jnp.max(jnp.abs(y - ref)) < 1e-5

    ref_bf16 = (jnp.tanh(x_bf16.astype(jnp.float32)) * MAX_ACTION).astype(jnp.bfloat16)
    assert y_bf16.shape == x_bf16.shape and y_bf16.dtype == jnp.bfloat16
    assert jnp.max(jnp.abs(y_bf16.astype(jnp.float32)
                           - ref_bf16.astype(jnp.float32))) < 3e-2

    print("KERNEL_OK")
</pallas_src>

<mosaic_0001>
module attributes {stable_mosaic.version = 11 : i64} {
  func.func @_scaled_tanh_kernel(%arg0: i32, %arg1: i32, %arg2: memref<8x128xf32, #tpu.memory_space<vmem>>, %arg3: memref<8x128xf32, #tpu.memory_space<vmem>>) attributes {dimension_semantics = [#tpu.dimension_semantics<parallel>, #tpu.dimension_semantics<parallel>], iteration_bounds = array<i64: 1, 1>, scalar_prefetch = 0 : i64, scratch_operands = 0 : i64, tpu.core_type = #tpu.core_type<tc>, window_params = [{transform_indices = @transform_0, window_bounds = array<i64: 8, 128>}, {transform_indices = @transform_1, window_bounds = array<i64: 8, 128>}]} {
    %c0 = arith.constant 0 : index
    %c0_0 = arith.constant 0 : index
    %0 = vector.load %arg2[%c0, %c0_0] : memref<8x128xf32, #tpu.memory_space<vmem>>, vector<8x128xf32>
    %1 = math.tanh %0 : vector<8x128xf32>
    %cst = arith.constant 2.000000e+00 : f32
    %2 = vector.broadcast %cst : f32 to vector<8x128xf32>
    %3 = arith.mulf %1, %2 : vector<8x128xf32>
    %c0_1 = arith.constant 0 : index
    %c0_2 = arith.constant 0 : index
    %4 = vector.load %arg3[%c0_1, %c0_2] : memref<8x128xf32, #tpu.memory_space<vmem>>, vector<8x128xf32>
    tpu.vector_store %arg3[%c0_1, %c0_2], %3 {strides = array<i32>} : memref<8x128xf32, #tpu.memory_space<vmem>>, vector<8x128xf32>,
    return
  }
  func.func @transform_0(%arg0: i32, %arg1: i32) -> (i32, i32) {
    %c0_i32 = arith.constant 0 : i32
    return %arg0, %arg1 : i32, i32
  }
  func.func @transform_1(%arg0: i32, %arg1: i32) -> (i32, i32) {
    %c0_i32 = arith.constant 0 : i32
    return %arg0, %arg1 : i32, i32
  }
}

</mosaic_0001>

<llo_original>
// kernel: tpu_custom_call.1
$region0: #{tpu_custom_call.1}
  #allocation0 [shape = 'u32[]', space=smem, size = 0x4, offset = 0x4, fixed_abs, tag = 'smem constant byte address 0x4 - core index']
  #allocation1 [shape = 'u32[72,128]{1,0:T(1,128)}', space=vmem, size = 0x9000, scoped, tag = 'internal scratch']
  %s0 = inlined_call_operand.hbm [shape: f32[8,128], index: 0, kind: input, shape index: {}]
  %s1 = inlined_call_operand.hbm [shape: f32[8,128], index: 1, kind: output, shape index: {}]
  %s2 = sld [smem:[#allocation0]]
  $region18: #{tpu_custom_call.1} parent=0
    _
  %s4 = ssub.s32 1, %s2
  %s5 = scalar_select 0, %s4, %s2
  $region1: #{tpu_custom_call.1} parent=0
    #allocation2 [shape = 'u8[4096]{0}', space=vmem, size = 0x1000, scoped, tag = 'input window, operand 0, single buffered']
    #allocation3 [shape = 's32[1]{0}', space=sflag, size = 0x4, scoped, tag = 'scoped memory for tpu_custom_call.1']
    #allocation4 [shape = 's32[1]{0}', space=sflag, size = 0x4, scoped, tag = 'scoped memory for tpu_custom_call.1']
    #allocation5 [shape = 'u8[4096]{0}', space=vmem, size = 0x1000, scoped, tag = 'output window, operand 0, single buffered']
    %6 = vsyncpa [#allocation3], 0
    %7 = vsyncpa [#allocation4], 0
    // Predicated region
    $region2: #{tpu_custom_call.1} parent=1 // pred_check
      _
    $region3: #{tpu_custom_call.1} parent=1 // pred_check_branch
      %9 = sbr.rel (0) target = $region5
    $region4: #{tpu_custom_call.1} parent=1 // pred_region
      %11 = vsyncadd [#allocation3], 0
      %s13 = sshll.u32 %s0, 4
      %s14 = int_to_ptr.hbm [resolvable:$true] %s13
      %s15 = sshll.u32 [#allocation2], 4
      %s16 = int_to_ptr.vmem [resolvable:$true] %s15
      %18 = dma.hbm_to_vmem [thread:$0]  %s14, 128, %s16, [#allocation3]
    $region5: #{tpu_custom_call.1} parent=1 // pred_fallthru
      _
    // Predicated region
    $region6: #{tpu_custom_call.1} parent=1 // pred_check
      _
    $region7: #{tpu_custom_call.1} parent=1 // pred_check_branch
      %20 = sbr.rel (0) target = $region9
    $region8: #{tpu_custom_call.1} parent=1 // pred_region
      %22 = dma.done [#allocation3], 128
    $region9: #{tpu_custom_call.1} parent=1 // pred_fallthru
      _
    %v23 = vld [vmem:[#allocation2] sm:$0xff]
    %v24 = vtanh.pop %v23
    %v25 = vmul.f32 %v24, 2.0
    %26 = vst [vmem:[#allocation5] sm:$0xff] %v25
    // Predicated region
    $region10: #{tpu_custom_call.1} parent=1 // pred_check
      _
    $region11: #{tpu_custom_call.1} parent=1 // pred_check_branch
      %28 = sbr.rel (0) target = $region13
    $region12: #{tpu_custom_call.1} parent=1 // pred_region
      %30 = vsyncadd [#allocation4], 0
      %s32 = sshll.u32 [#allocation5], 4
      %s33 = int_to_ptr.vmem [resolvable:$true] %s32
      %s34 = sshll.u32 %s1, 4
      %s35 = int_to_ptr.hbm [resolvable:$true] %s34
      %37 = dma.vmem_to_hbm [thread:$0]  %s33, 128, %s35, [#allocation4]
    $region13: #{tpu_custom_call.1} parent=1 // pred_fallthru
      _
    // Predicated region
    $region14: #{tpu_custom_call.1} parent=1 // pred_check
      _
    $region15: #{tpu_custom_call.1} parent=1 // pred_check_branch
      %39 = sbr.rel (0) target = $region17
    $region16: #{tpu_custom_call.1} parent=1 // pred_region
      %41 = dma.done [#allocation4], 128
    $region17: #{tpu_custom_call.1} parent=1 // pred_fallthru
      _
    %42 = vsyncpa [#allocation3], 1
    %43 = vsyncpa [#allocation4], 1

</llo_original>
